<compile_context>
chip_gen: v7x
topology: tpu7x:2x2x1
jax: 0.10.0
libtpu: 0.0.40
codegen_flags: <defaults>
</compile_context>

<pallas_src>
import functools

import jax
import jax.numpy as jnp
from jax.experimental import pallas as pl
from jax.experimental.pallas import tpu as pltpu

IMAGENET_MEAN = (0.485, 0.456, 0.406)
IMAGENET_STD = (0.229, 0.224, 0.225)

EPS_MIN = 1e-5     # dist / (dist_min + 1e-5)
EPS_LOG = 1e-5     # -log(contextual + 1e-5)
EPS_NORM = 1e-12   # F.normalize default eps


# ---------------------------------------------------------------------------
# Per-generation hardware parameters
# ---------------------------------------------------------------------------
def _tpu_params():
    """Returns (vmem_capacity_bytes, eup_supports_bf16) for the local TPU."""
    kind = ""
    try:
        kind = jax.devices()[0].device_kind.lower()
    except Exception:
        pass
    vmem = None
    try:
        vmem = int(pltpu.get_tpu_info().vmem_capacity_bytes)
    except Exception:
        vmem = None
    if not vmem or vmem <= 0:
        vmem = (64 << 20) if "v7" in kind else (128 << 20)
    # v6e / v7x have a bf16-capable EUP; v5e (and older) do not.
    eup_bf16 = ("v6" in kind) or ("v7" in kind)
    return vmem, eup_bf16


# ---------------------------------------------------------------------------
# Stand-in feature extractor (normalize + 3x3 conv + ReLU)
# ---------------------------------------------------------------------------
def _normalize_nchw(x, mean, std):
    return (x - mean.reshape(1, 3, 1, 1)) / std.reshape(1, 3, 1, 1)


def _conv3x3_relu_features(x, weight, bias):
    # TODO(synk): the pretrained torchvision VGG19 feature extractor
    # (create_feature_extractor + IMAGENET1K_V1 checkpoint) cannot be
    # reproduced here; a deterministic 3x3 conv + ReLU stands in, evaluated
    # with XLA's native conv (NHWC output, no im2col HBM expansion).
    y = jax.lax.conv_general_dilated(
        x, weight,
        window_strides=(1, 1),
        padding=((1, 1), (1, 1)),
        dimension_numbers=("NCHW", "OIHW", "NHWC"))          # (B, H, W, C)
    y = jnp.maximum(y + bias[None, None, None, :], 0.0)
    b, h, w, c = y.shape
    return y.reshape(b, h * w, c)                             # (B, N, C) f32


def _center_and_normalize(feat, y_mean):
    # F.normalize(p=2, dim=C): v / max(||v||, eps), per spatial position, f32.
    centered = feat - y_mean
    norm = jnp.sqrt(jnp.sum(centered * centered, axis=-1, keepdims=True))
    return centered / jnp.maximum(norm, EPS_NORM)


# ---------------------------------------------------------------------------
# Contextual-loss kernel: cosine matmul, fused relative-distance softmax,
# carried (8, N) column max, per-batch -log(mean).
# ---------------------------------------------------------------------------
def _contextual_kernel(xn_ref, ynt_ref, o_ref, cmax_ref, *,
                       n_total, inv_bw, exp_bf16, cmax_rows):
    i = pl.program_id(1)
    n_i = pl.num_programs(1)

    @pl.when(i == 0)
    def _():
        cmax_ref[...] = jnp.zeros_like(cmax_ref)   # contextual > 0, 0 is identity

    xn = xn_ref[0]                                  # (Ti, C) bf16, pre-normalized
    # (Ti, C) x (C, N) on the MXU, bf16 in / f32 accumulate. gt is stored
    # pre-transposed as (C, N) -> no per-step XLU transpose of the rhs.
    cos = jax.lax.dot_general(
        xn, ynt_ref[0], (((1,), (0,)), ((), ())),
        preferred_element_type=jnp.float32)         # (Ti, N)

    # Fused chain:  dist = 1-cos ; dmin = 1 - rowmax(cos)
    #               rel = dist/(dmin+eps) ; logits = (1-rel)/bw
    # softmax_j(logits) == exp(a*(cos - rowmax(cos))) / rowsum(...)
    # with a = (1/bw)/(dmin + eps) > 0 (per-row constants cancel analytically).
    cos_rowmax = jnp.max(cos, axis=1, keepdims=True)           # (Ti, 1)
    dmin = jnp.maximum(1.0 - cos_rowmax, 0.0)                  # guard bf16 cos > 1
    a = inv_bw / (dmin + EPS_MIN)                              # (Ti, 1), exact divide
    z = a * (cos - cos_rowmax)                                 # (Ti, N), <= 0
    if exp_bf16:
        # v6e/v7x: bf16 EUP -> ~2x transcendental throughput, half the vreg
        # traffic for the dominant (Ti, N) pass.
        e = jnp.exp(z.astype(jnp.bfloat16)).astype(jnp.float32)
    else:
        e = jnp.exp(z)                                         # v5e: f32 EUP only
    inv_rsum = 1.0 / jnp.sum(e, axis=1, keepdims=True)         # (Ti, 1), exact

    # Carried column max over all row tiles: keep 8 sublane-wise partial maxima
    # (pure VPU vreg maxima, the softmax normalization fused into the same
    # expression); collapse the 8 sublanes only once, in the epilogue.
    ti = e.shape[0]
    if cmax_rows == 8:
        tile_max = jnp.max((e * inv_rsum).reshape(ti // 8, 8, e.shape[1]), axis=0)
    else:
        tile_max = jnp.max(e * inv_rsum, axis=0, keepdims=True)
    cmax_ref[...] = jnp.maximum(cmax_ref[...], tile_max)

    @pl.when(i == n_i - 1)
    def _():
        colmax = jnp.max(cmax_ref[...], axis=0, keepdims=True)          # (1, N)
        mean_ctx = jnp.sum(colmax, axis=1, keepdims=True) * (1.0 / n_total)
        o_ref[0] = -jnp.log(mean_ctx + EPS_LOG)                 # per-batch loss


# ---------------------------------------------------------------------------
# Tiling / VMEM sizing (generation-aware)
# ---------------------------------------------------------------------------
_ROW_TILE_CANDIDATES = (1024, 512, 256, 128, 64, 32, 16)


def _pick_row_tile(n, c, vmem_bytes):
    """Largest row tile whose (Ti,N) f32 temporaries + resident gt buffer fit
    ~70% of this generation's VMEM."""
    budget = int(vmem_bytes * 0.70)
    resident = 2 * c * n * 2 + 8 * n * 4        # gt (C,N) double buffer + col max
    candidates = [t for t in _ROW_TILE_CANDIDATES if t <= n and n % t == 0]
    for t in candidates:
        need = resident + 2 * t * c * 2 + 4 * t * n * 4
        if need <= budget:
            return t
    if candidates:
        # TODO(synk): for N so large that even Ti=16 blows VMEM, add an Nj
        # column-tiling (online-softmax) pass instead of shrinking Ti further.
        return candidates[-1]
    return n        # ragged N: a single full-extent block is always legal


def _vmem_limit_bytes(n, c, ti, vmem_capacity):
    need = (2 * ti * c * 2       # sr row tile (double-buffered, bf16)
            + 2 * c * n * 2      # gt (C, N) block (double-buffered, bf16)
            + 8 * n * 4          # carried column-max scratch
            + 4 * ti * n * 4)    # cos / exp / softmax temporaries (f32)
    est = int(need * 1.5) + (1 << 20)            # headroom for compiler temps
    return max(16 << 20, min(est, int(vmem_capacity * 0.9)))


def contextual_loss_per_batch(xn, ynt, bandwidth):
    """xn: (B, N, C) bf16 normalized sr features; ynt: (B, C, N) bf16 normalized
    gt features (pre-transposed). Returns (B,) per-batch contextual loss."""
    B, N, C = xn.shape
    vmem_bytes, eup_bf16 = _tpu_params()
    ti = _pick_row_tile(N, C, vmem_bytes)
    n_i = N // ti
    cmax_rows = 8 if ti % 8 == 0 else 1

    kernel = functools.partial(
        _contextual_kernel,
        n_total=N, inv_bw=float(1.0 / bandwidth),
        exp_bf16=eup_bf16, cmax_rows=cmax_rows)

    out = pl.pallas_call(
        kernel,
        out_shape=jax.ShapeDtypeStruct((B, 1, 1), jnp.float32),
        grid_spec=pltpu.PrefetchScalarGridSpec(
            num_scalar_prefetch=0,
            grid=(B, n_i),
            in_specs=[
                pl.BlockSpec((1, ti, C), lambda b, i: (b, i, 0)),  # sr row tile
                pl.BlockSpec((1, C, N), lambda b, i: (b, 0, 0)),   # gt (C,N) per b
            ],
            out_specs=pl.BlockSpec((1, 1, 1), lambda b, i: (b, 0, 0)),
            scratch_shapes=[
                pltpu.VMEM((cmax_rows, N), jnp.float32),           # carried col max
            ],
        ),
        compiler_params=pltpu.CompilerParams(
            # TODO(synk): for B == 1 on v7x, split the row-tile axis across the
            # two TensorCores (per-core partial column max + tiny combine).
            dimension_semantics=("parallel", "arbitrary"),
            vmem_limit_bytes=_vmem_limit_bytes(N, C, ti, vmem_bytes),
        ),
    )(xn, ynt)
    return out.reshape(B)


# ---------------------------------------------------------------------------
# Module-equivalent wrapper
# ---------------------------------------------------------------------------
class ContextualLossPallas:
    def __init__(self, feat_channels=32, bandwidth=0.5, seed=42):
        self.bandwidth = float(bandwidth)
        kw, kb = jax.random.split(jax.random.PRNGKey(seed))
        # Deterministic synthetic conv weights, PyTorch layout (Cout, Cin, kh, kw).
        # NOTE: small C (32) pads the sr-feature lane axis 4x; with real VGG19
        # features (C >= 128) this goes away.
        self.weight = jax.random.normal(kw, (feat_channels, 3, 3, 3),
                                        jnp.float32) * 0.1
        self.bias = jax.random.normal(kb, (feat_channels,), jnp.float32) * 0.01
        self.mean = jnp.array(IMAGENET_MEAN, jnp.float32)
        self.std = jnp.array(IMAGENET_STD, jnp.float32)
        self._forward = jax.jit(self._forward_impl)

    def _forward_impl(self, sr_tensor, gt_tensor):
        sr = _normalize_nchw(sr_tensor, self.mean, self.std)
        gt = _normalize_nchw(gt_tensor, self.mean, self.std)
        x_feat = _conv3x3_relu_features(sr, self.weight, self.bias)   # (B, N, C)
        y_feat = _conv3x3_relu_features(gt, self.weight, self.bias)   # (B, N, C)
        # y.mean(dim=(0,2,3)) + centering + L2 normalization hoisted out of the
        # kernel (done once, in f32, by XLA); features are handed to the kernel
        # already normalized, in bf16, with gt pre-transposed to (B, C, N).
        y_mean = jnp.mean(y_feat, axis=(0, 1), keepdims=True)         # (1, 1, C)
        xn = _center_and_normalize(x_feat, y_mean).astype(jnp.bfloat16)
        yn = _center_and_normalize(y_feat, y_mean)
        ynt = jnp.swapaxes(yn, 1, 2).astype(jnp.bfloat16)             # (B, C, N)
        per_batch = contextual_loss_per_batch(xn, ynt, self.bandwidth)
        return jnp.mean(per_batch)                                    # mean over B

    def __call__(self, sr_tensor, gt_tensor):
        assert sr_tensor.shape == gt_tensor.shape, \
            "Two tensor must have the same size"
        return self._forward(sr_tensor, gt_tensor)


if __name__ == "__main__":
    key = jax.random.PRNGKey(0)
    k1, k2 = jax.random.split(key)
    sr = jax.random.uniform(k1, (2, 3, 16, 16), dtype=jnp.float32)
    gt = jax.random.uniform(k2, (2, 3, 16, 16), dtype=jnp.float32)

    loss_fn = ContextualLossPallas(feat_channels=32, bandwidth=0.5)
    loss = loss_fn(sr, gt)
    jax.block_until_ready(loss)
    print("KERNEL_OK")
</pallas_src>

<mosaic_0001>
module attributes {stable_mosaic.version = 11 : i64} {
  func.func @_contextual_kernel(%arg0: i32, %arg1: i32, %arg2: memref<1x256x32xbf16, #tpu.memory_space<vmem>>, %arg3: memref<1x32x256xbf16, #tpu.memory_space<vmem>>, %arg4: memref<1x1x1xf32, #tpu.memory_space<vmem>>, %arg5: memref<8x256xf32, #tpu.memory_space<vmem>>) attributes {dimension_semantics = [#tpu.dimension_semantics<parallel>, #tpu.dimension_semantics<arbitrary>], iteration_bounds = array<i64: 2, 1>, scalar_prefetch = 0 : i64, scratch_operands = 1 : i64, tpu.core_type = #tpu.core_type<tc>, window_params = [{transform_indices = @transform_0, window_bounds = array<i64: 1, 256, 32>}, {transform_indices = @transform_1, window_bounds = array<i64: 1, 32, 256>}, {transform_indices = @transform_2, window_bounds = array<i64: 1, 1, 1>}]} {
    %c0_i32 = arith.constant 0 : i32
    %0 = arith.cmpi eq, %arg1, %c0_i32 : i32
    %1 = arith.extui %0 : i1 to i32
    %c0_i32_0 = arith.constant 0 : i32
    %2 = arith.cmpi ne, %1, %c0_i32_0 : i32
    scf.if %2 {
      %cst_20 = arith.constant 0.000000e+00 : f32
      %37 = vector.broadcast %cst_20 : f32 to vector<8x256xf32>
      %c0_21 = arith.constant 0 : index
      %c0_22 = arith.constant 0 : index
      %38 = vector.load %arg5[%c0_21, %c0_22] : memref<8x256xf32, #tpu.memory_space<vmem>>, vector<8x256xf32>
      tpu.vector_store %arg5[%c0_21, %c0_22], %37 {strides = array<i32>} : memref<8x256xf32, #tpu.memory_space<vmem>>, vector<8x256xf32>,
    } else {
    }
    %c0 = arith.constant 0 : index
    %c0_1 = arith.constant 0 : index
    %c0_2 = arith.constant 0 : index
    %3 = vector.load %arg2[%c0, %c0_1, %c0_2] : memref<1x256x32xbf16, #tpu.memory_space<vmem>>, vector<1x256x32xbf16>
    %4 = vector.shape_cast %3 : vector<1x256x32xbf16> to vector<256x32xbf16>
    %c0_3 = arith.constant 0 : index
    %c0_4 = arith.constant 0 : index
    %c0_5 = arith.constant 0 : index
    %5 = vector.load %arg3[%c0_3, %c0_4, %c0_5] : memref<1x32x256xbf16, #tpu.memory_space<vmem>>, vector<1x32x256xbf16>
    %6 = vector.shape_cast %5 : vector<1x32x256xbf16> to vector<32x256xbf16>
    %cst = arith.constant dense<0.000000e+00> : vector<256x256xf32>
    %7 = tpu.matmul %4, %6, %cst {dimension_numbers = #tpu.dot_dimension_numbers<[1], [0], [0], [1], [0, 0, 1, 1], [], []>} : vector<256x32xbf16>, vector<32x256xbf16>, vector<256x256xf32> -> vector<256x256xf32>
    %cst_6 = arith.constant dense<0xFF800000> : vector<256xf32>
    %8 = vector.multi_reduction <maximumf>, %7, %cst_6 [1] : vector<256x256xf32> to vector<256xf32>
    %9 = vector.shape_cast %8 : vector<256xf32> to vector<256x1xf32>
    %cst_7 = arith.constant 1.000000e+00 : f32
    %10 = vector.broadcast %cst_7 : f32 to vector<256x1xf32>
    %11 = arith.subf %10, %9 : vector<256x1xf32>
    %cst_8 = arith.constant 0.000000e+00 : f32
    %12 = vector.broadcast %cst_8 : f32 to vector<256x1xf32>
    %13 = arith.maximumf %11, %12 : vector<256x1xf32>
    %cst_9 = arith.constant 9.99999974E-6 : f32
    %14 = vector.broadcast %cst_9 : f32 to vector<256x1xf32>
    %15 = arith.addf %13, %14 : vector<256x1xf32>
    %cst_10 = arith.constant 2.000000e+00 : f32
    %16 = vector.broadcast %cst_10 : f32 to vector<256x1xf32>
    %17 = arith.divf %16, %15 : vector<256x1xf32>
    %18 = vector.broadcast %9 : vector<256x1xf32> to vector<256x256xf32>
    %19 = arith.subf %7, %18 : vector<256x256xf32>
    %20 = vector.broadcast %17 : vector<256x1xf32> to vector<256x256xf32>
    %21 = arith.mulf %20, %19 : vector<256x256xf32>
    %22 = math.exp %21 : vector<256x256xf32>
    %cst_11 = arith.constant dense<0.000000e+00> : vector<256xf32>
    %23 = vector.multi_reduction <add>, %22, %cst_11 [1] : vector<256x256xf32> to vector<256xf32>
    %24 = vector.shape_cast %23 : vector<256xf32> to vector<256x1xf32>
    %cst_12 = arith.constant 1.000000e+00 : f32
    %25 = vector.broadcast %cst_12 : f32 to vector<256x1xf32>
    %26 = arith.divf %25, %24 : vector<256x1xf32>
    %27 = vector.broadcast %26 : vector<256x1xf32> to vector<256x256xf32>
    %28 = arith.mulf %22, %27 : vector<256x256xf32>
    %29 = vector.shape_cast %28 : vector<256x256xf32> to vector<32x8x256xf32>
    %cst_13 = arith.constant dense<0xFF800000> : vector<8x256xf32>
    %30 = vector.multi_reduction <maximumf>, %29, %cst_13 [0] : vector<32x8x256xf32> to vector<8x256xf32>
    %c0_14 = arith.constant 0 : index
    %c0_15 = arith.constant 0 : index
    %31 = vector.load %arg5[%c0_14, %c0_15] : memref<8x256xf32, #tpu.memory_space<vmem>>, vector<8x256xf32>
    %32 = arith.maximumf %31, %30 : vector<8x256xf32>
    %c0_16 = arith.constant 0 : index
    %c0_17 = arith.constant 0 : index
    %33 = vector.load %arg5[%c0_16, %c0_17] : memref<8x256xf32, #tpu.memory_space<vmem>>, vector<8x256xf32>
    tpu.vector_store %arg5[%c0_16, %c0_17], %32 {strides = array<i32>} : memref<8x256xf32, #tpu.memory_space<vmem>>, vector<8x256xf32>,
    %c0_i32_18 = arith.constant 0 : i32
    %34 = arith.cmpi eq, %arg1, %c0_i32_18 : i32
    %35 = arith.extui %34 : i1 to i32
    %c0_i32_19 = arith.constant 0 : i32
    %36 = arith.cmpi ne, %35, %c0_i32_19 : i32
    scf.if %36 {
      %c0_20 = arith.constant 0 : index
      %c0_21 = arith.constant 0 : index
      %37 = vector.load %arg5[%c0_20, %c0_21] : memref<8x256xf32, #tpu.memory_space<vmem>>, vector<8x256xf32>
      %cst_22 = arith.constant dense<0xFF800000> : vector<256xf32>
      %38 = vector.multi_reduction <maximumf>, %37, %cst_22 [0] : vector<8x256xf32> to vector<256xf32>
      %39 = vector.shape_cast %38 : vector<256xf32> to vector<1x256xf32>
      %cst_23 = arith.constant dense<0.000000e+00> : vector<1xf32>
      %40 = vector.multi_reduction <add>, %39, %cst_23 [1] : vector<1x256xf32> to vector<1xf32>
      %41 = vector.shape_cast %40 : vector<1xf32> to vector<1x1xf32>
      %cst_24 = arith.constant 3.906250e-03 : f32
      %42 = vector.broadcast %cst_24 : f32 to vector<1x1xf32>
      %43 = arith.mulf %41, %42 : vector<1x1xf32>
      %cst_25 = arith.constant 9.99999974E-6 : f32
      %44 = vector.broadcast %cst_25 : f32 to vector<1x1xf32>
      %45 = arith.addf %43, %44 : vector<1x1xf32>
      %46 = math.log %45 : vector<1x1xf32>
      %cst_26 = arith.constant 0.000000e+00 : f32
      %47 = vector.broadcast %cst_26 : f32 to vector<1x1xf32>
      %48 = arith.subf %47, %46 : vector<1x1xf32>
      %c0_27 = arith.constant 0 : index
      %c0_28 = arith.constant 0 : index
      %c0_29 = arith.constant 0 : index
      %49 = vector.load %arg4[%c0_27, %c0_28, %c0_29] : memref<1x1x1xf32, #tpu.memory_space<vmem>>, vector<1x1x1xf32>
      %50 = vector.shape_cast %49 : vector<1x1x1xf32> to vector<1x1xf32>
      %51 = vector.shape_cast %48 : vector<1x1xf32> to vector<1x1x1xf32>
      tpu.vector_store %arg4[%c0_27, %c0_28, %c0_29], %51 {strides = array<i32>} : memref<1x1x1xf32, #tpu.memory_space<vmem>>, vector<1x1x1xf32>,
    } else {
    }
    return
  }
  func.func @transform_0(%arg0: i32, %arg1: i32) -> (i32, i32, i32) {
    %c0_i32 = arith.constant 0 : i32
    %c0_i32_0 = arith.constant 0 : i32
    return %arg0, %arg1, %c0_i32 : i32, i32, i32
  }
  func.func @transform_1(%arg0: i32, %arg1: i32) -> (i32, i32, i32) {
    %c0_i32 = arith.constant 0 : i32
    %c0_i32_0 = arith.constant 0 : i32
    %c0_i32_1 = arith.constant 0 : i32
    return %arg0, %c0_i32, %c0_i32_0 : i32, i32, i32
  }
  func.func @transform_2(%arg0: i32, %arg1: i32) -> (i32, i32, i32) {
    %c0_i32 = arith.constant 0 : i32
    %c0_i32_0 = arith.constant 0 : i32
    %c0_i32_1 = arith.constant 0 : i32
    return %arg0, %c0_i32, %c0_i32_0 : i32, i32, i32
  }
}

</mosaic_0001>

<llo_original>
// kernel: _forward_impl.1
$region0: #{_forward_impl.1}
  #allocation0 [shape = 'u32[]', space=smem, size = 0x4, offset = 0x4, fixed_abs, tag = 'smem constant byte address 0x4 - core index']
  #allocation1 [shape = 'u32[144,128]{1,0:T(1,128)}', space=vmem, size = 0x12000, scoped, tag = 'internal scratch']
  #allocation2 [shape = 'f32[8,256]{1,0:T(8,128)}', space=vmem, size = 0x2000, scoped, tag = 'scratch operand']
  %s0 = inlined_call_operand.vmem [shape: bf16[2,256,32], index: 0, kind: input, shape index: {}]
  %s1 = inlined_call_operand.vmem [shape: bf16[2,32,256], index: 1, kind: input, shape index: {}]
  %s2 = inlined_call_operand.vmem [shape: f32[2,1,1], index: 2, kind: output, shape index: {}]
  %s3 = sld [smem:[#allocation0]]
  $region49: #{_forward_impl.1} parent=0
    _
  %s5 = ssub.s32 1, %s3
  %s6 = scalar_select 0, %s5, %s3
  loop: start=0, step=1, limit=4
  $region2: #{_forward_impl.1} parent=0 // loop_pre_header
    _
  $region3: #{_forward_impl.1} parent=0 // loop_header
    %s8 = sphi 0, %s12
    %p9 = scmp.ge.s32.totalorder %s8, 4
    %s15 = sphi 0, %s27
    %s16 = sphi 0, %s23
    %s17 = sphi 0, %s15
    %s18 = sphi 0, %s16
    %s19 = sphi 0, %s17
    %s20 = sphi 0, %s18
    %s32 = sphi 0, %s34
    %s35 = sphi 0, %s32
    %s36 = sphi 0, %s35
    %s52 = sphi 0, %s36
    %s58 = sphi 0, %s60
    %s61 = sphi 0, %s58
    %s62 = sphi 0, %s61
    %s78 = sphi 0, %s62
    %s84 = sphi 0, %s86
    %s87 = sphi 0, %s84
    %s88 = sphi 0, %s87
    %s104 = sphi 0, %s88
  $region4: #{_forward_impl.1} parent=0 // loop_header_branch
    %11 = sbr.rel (%p9) target = $region8
  $region5: #{_forward_impl.1} parent=0 // loop_body
    %s13 = ssub.s32 %s8, 1
    %s14 = ssub.s32 %s8, 2
    %s21 = sadd.s32 1, %s16
    %p22 = scmp.ge.s32.totalorder %s21, 1
    %s23 = scalar_select %p22, 0, %s21
    %s24 = sadd.s32 1, %s15
    %s25 = scalar_select %p22, %s24, %s15
    %p26 = scmp.ge.s32.totalorder %s25, 2
    %s27 = scalar_select %p26, 0, %s25
    %s28 = ssub.s32 %s15, %s27
    %s29 = ssub.s32 %s16, %s23
    %s30 = sor.u32 %s28, %s29
    %p31 = scmp.eq.s32.totalorder %s30, 0
    %s33 = sadd.s32 %s32, 1
    %s34 = scalar_select %p31, %s32, %s33
    %p37 = pneg %p31
    %p38 = scmp.eq.s32.totalorder %s8, 1
    %p39 = por %p37, %p38
    %p40 = scmp.ne.s32.totalorder %s32, %s35
    %p41 = scmp.eq.s32.totalorder %s8, 0
    %p42 = por %p40, %p41
    %p43 = scmp.ne.s32.totalorder %s32, %s35
    %p44 = scmp.eq.s32.totalorder %s13, 1
    %p45 = por %p43, %p44
    %p46 = scmp.ne.s32.totalorder %s35, %s36
    %p47 = scmp.eq.s32.totalorder %s13, 0
    %p48 = por %p46, %p47
    %p49 = scmp.ne.s32.totalorder %s35, %s36
    %p50 = scmp.eq.s32.totalorder %s14, 1
    %p51 = por %p49, %p50
    %p53 = scmp.ne.s32.totalorder %s36, %s52
    %p54 = scmp.eq.s32.totalorder %s14, 0
    %p55 = por %p53, %p54
    %s56 = ssub.s32 %s15, %s27
    %p57 = scmp.eq.s32.totalorder %s56, 0
    %s59 = sadd.s32 %s58, 1
    %s60 = scalar_select %p57, %s58, %s59
    %p63 = pneg %p57
    %p64 = scmp.eq.s32.totalorder %s8, 1
    %p65 = por %p63, %p64
    %p66 = scmp.ne.s32.totalorder %s58, %s61
    %p67 = scmp.eq.s32.totalorder %s8, 0
    %p68 = por %p66, %p67
    %p69 = scmp.ne.s32.totalorder %s58, %s61
    %p70 = scmp.eq.s32.totalorder %s13, 1
    %p71 = por %p69, %p70
    %p72 = scmp.ne.s32.totalorder %s61, %s62
    %p73 = scmp.eq.s32.totalorder %s13, 0
    %p74 = por %p72, %p73
    %p75 = scmp.ne.s32.totalorder %s61, %s62
    %p76 = scmp.eq.s32.totalorder %s14, 1
    %p77 = por %p75, %p76
    %p79 = scmp.ne.s32.totalorder %s62, %s78
    %p80 = scmp.eq.s32.totalorder %s14, 0
    %p81 = por %p79, %p80
    %s82 = ssub.s32 %s15, %s27
    %p83 = scmp.eq.s32.totalorder %s82, 0
    %s85 = sadd.s32 %s84, 1
    %s86 = scalar_select %p83, %s84, %s85
    %p89 = pneg %p83
    %p90 = scmp.eq.s32.totalorder %s8, 1
    %p91 = por %p89, %p90
    %p92 = scmp.ne.s32.totalorder %s84, %s87
    %p93 = scmp.eq.s32.totalorder %s8, 0
    %p94 = por %p92, %p93
    %p95 = scmp.ne.s32.totalorder %s84, %s87
    %p96 = scmp.eq.s32.totalorder %s13, 1
    %p97 = por %p95, %p96
    %p98 = scmp.ne.s32.totalorder %s87, %s88
    %p99 = scmp.eq.s32.totalorder %s13, 0
    %p100 = por %p98, %p99
    %p101 = scmp.ne.s32.totalorder %s87, %s88
    %p102 = scmp.eq.s32.totalorder %s14, 1
    %p103 = por %p101, %p102
    %p105 = scmp.ne.s32.totalorder %s88, %s104
    %p106 = scmp.eq.s32.totalorder %s14, 0
    %p107 = por %p105, %p106
    %p108 = scmp.le.s32.totalorder 1, %s8
    %p109 = scmp.lt.s32.totalorder %s8, 3
    %p110 = pnand %p108, %p109
    %p111 = pneg %p110
    // Predicated region
    $region9: #{_forward_impl.1} parent=5 // pred_check
      _
    $region10: #{_forward_impl.1} parent=5 // pred_check_branch
      %113 = sbr.rel (%p110) target = $region12
    $region11: #{_forward_impl.1} parent=5 // pred_region
      %s114 = ssub.s32 %s8, 1
    $region12: #{_forward_impl.1} parent=5 // pred_fallthru
      _
    %p115 = scmp.lt.s32.totalorder %s8, 2
    // Predicated region
    $region13: #{_forward_impl.1} parent=5 // pred_check
      %p116 = pneg %p115
    $region14: #{_forward_impl.1} parent=5 // pred_check_branch
      %118 = sbr.rel (%p116) target = $region16
    $region15: #{_forward_impl.1} parent=5 // pred_region
      // Predicated region
      $region17: #{_forward_impl.1} parent=15 // pred_check
        %p119 = pneg %p42
      $region18: #{_forward_impl.1} parent=15 // pred_check_branch
        %121 = sbr.rel (%p119) target = $region20
      $region19: #{_forward_impl.1} parent=15 // pred_region
        %s122 = smul.u32 32, %s16
        %p123 = scmp.lt.s32.totalorder %s15, 1
        %s124 = scalar_select %p123, %s15, 1
        %p125 = scmp.lt.s32.totalorder %s122, 31
        %s126 = scalar_select %p125, %s122, 31
        %s127 = smul.addr %s124, 32
        %s128 = sadd.s32 %s126, %s127
        %s129 = smul.addr %s128, 4
        %s130 = scalar_lea.vmem %s0, %s129
        %s131 = smul.u32 32, %s16
      $region20: #{_forward_impl.1} parent=15 // pred_fallthru
        _
      // Predicated region
      $region21: #{_forward_impl.1} parent=15 // pred_check
        %p132 = pneg %p68
      $region22: #{_forward_impl.1} parent=15 // pred_check_branch
        %134 = sbr.rel (%p132) target = $region24
      $region23: #{_forward_impl.1} parent=15 // pred_region
        %p135 = scmp.lt.s32.totalorder %s15, 1
        %s136 = scalar_select %p135, %s15, 1
        %s137 = smul.addr %s136, 8
        %s138 = smul.addr %s137, 4
        %s139 = scalar_lea.vmem %s1, %s138
      $region24: #{_forward_impl.1} parent=15 // pred_fallthru
        _
    $region16: #{_forward_impl.1} parent=5 // pred_fallthru
      _
    %p140 = scmp.le.s32.totalorder 1, %s8
    %p141 = scmp.lt.s32.totalorder %s8, 3
    %p142 = pnand %p140, %p141
    %p143 = pneg %p142
    // Predicated region
    $region25: #{_forward_impl.1} parent=5 // pred_check
      _
    $region26: #{_forward_impl.1} parent=5 // pred_check_branch
      %145 = sbr.rel (%p142) target = $region28
    $region27: #{_forward_impl.1} parent=5 // pred_region
      %s146 = ssub.s32 %s8, 1
      %s147 = smul.u32 32, %s18
      %p148 = scmp.lt.s32.totalorder %s17, 1
      %s149 = scalar_select %p148, %s17, 1
      %p150 = scmp.lt.s32.totalorder %s147, 31
      %s151 = scalar_select %p150, %s147, 31
      %s152 = smul.addr %s149, 32
      %s153 = sadd.s32 %s151, %s152
      %s154 = smul.addr %s153, 4
      %s155 = scalar_lea.vmem %s0, %s154
      %p156 = pneg %p48
      %p157 = pneg %p45
      %p158 = scmp.lt.s32.totalorder %s17, 1
      %s159 = scalar_select %p158, %s17, 1
      %s160 = smul.addr %s159, 8
      %s161 = smul.addr %s160, 4
      %s162 = scalar_lea.vmem %s1, %s161
      %p163 = pneg %p74
      %p164 = pneg %p71
      %p165 = pneg %p100
      %p166 = pneg %p97
      %p167 = scmp.lt.s32.totalorder %s17, 1
      %s168 = scalar_select %p167, %s17, 1
      %s169 = scalar_lea.vmem %s2, %s168
      %s170 = smul.u32 32, %s18
      %p171 = scmp.lt.s32.totalorder %s17, 1
      %s172 = scalar_select %p171, %s17, 1
      %p173 = scmp.lt.s32.totalorder %s170, 31
      %s174 = scalar_select %p173, %s170, 31
      %s175 = smul.addr %s172, 32
      %s176 = sadd.s32 %s174, %s175
      %s177 = smul.addr %s176, 4
      %s178 = scalar_lea.vmem %s0, %s177
      %s179 = smul.u32 32, %s18
      %p180 = scmp.lt.s32.totalorder %s17, 1
      %s181 = scalar_select %p180, %s17, 1
      %s182 = smul.addr %s181, 8
      %s183 = smul.addr %s182, 4
      %s184 = scalar_lea.vmem %s1, %s183
      %p185 = scmp.lt.s32.totalorder %s17, 1
      %s186 = scalar_select %p185, %s17, 1
      %s187 = scalar_lea.vmem %s2, %s186
      %p189 = scmp.eq.s32.totalorder %s18, 0
      // Predicated region
      $region29: #{_forward_impl.1} parent=27 // pred_check
        %p190 = pneg %p189
      $region30: #{_forward_impl.1} parent=27 // pred_check_branch
        %192 = sbr.rel (%p190) target = $region32
      $region31: #{_forward_impl.1} parent=27 // pred_region
        %193 = vst [vmem:[#allocation2] sm:$0xff] 0.0
        %194 = vst [vmem:[#allocation2 + $0x8] sm:$0xff] 0.0
      $region32: #{_forward_impl.1} parent=27 // pred_fallthru
        _
      %v195 = vld [vmem:[%s178] sm:$0xf]
      %v196 = vld [vmem:[%s178 + $0x4] sm:$0xf]
      %v197 = vld [vmem:[%s178 + $0x8] sm:$0xf]
      %v198 = vld [vmem:[%s178 + $0xc] sm:$0xf]
      %v199 = vld [vmem:[%s178 + $0x10] sm:$0xf]
      %v200 = vld [vmem:[%s178 + $0x14] sm:$0xf]
      %v201 = vld [vmem:[%s178 + $0x18] sm:$0xf]
      %v202 = vld [vmem:[%s178 + $0x1c] sm:$0xf]
      %v203 = vld [vmem:[%s178 + $0x20] sm:$0xf]
      %v204 = vld [vmem:[%s178 + $0x24] sm:$0xf]
      %v205 = vld [vmem:[%s178 + $0x28] sm:$0xf]
      %v206 = vld [vmem:[%s178 + $0x2c] sm:$0xf]
      %v207 = vld [vmem:[%s178 + $0x30] sm:$0xf]
      %v208 = vld [vmem:[%s178 + $0x34] sm:$0xf]
      %v209 = vld [vmem:[%s178 + $0x38] sm:$0xf]
      %v210 = vld [vmem:[%s178 + $0x3c] sm:$0xf]
      %v211 = vld [vmem:[%s178 + $0x40] sm:$0xf]
      %v212 = vld [vmem:[%s178 + $0x44] sm:$0xf]
      %v213 = vld [vmem:[%s178 + $0x48] sm:$0xf]
      %v214 = vld [vmem:[%s178 + $0x4c] sm:$0xf]
      %v215 = vld [vmem:[%s178 + $0x50] sm:$0xf]
      %v216 = vld [vmem:[%s178 + $0x54] sm:$0xf]
      %v217 = vld [vmem:[%s178 + $0x58] sm:$0xf]
      %v218 = vld [vmem:[%s178 + $0x5c] sm:$0xf]
      %v219 = vld [vmem:[%s178 + $0x60] sm:$0xf]
      %v220 = vld [vmem:[%s178 + $0x64] sm:$0xf]
      %v221 = vld [vmem:[%s178 + $0x68] sm:$0xf]
      %v222 = vld [vmem:[%s178 + $0x6c] sm:$0xf]
      %v223 = vld [vmem:[%s178 + $0x70] sm:$0xf]
      %v224 = vld [vmem:[%s178 + $0x74] sm:$0xf]
      %v225 = vld [vmem:[%s178 + $0x78] sm:$0xf]
      %v226 = vld [vmem:[%s178 + $0x7c] sm:$0xf]
      %v227 = vld [vmem:[%s184] sm:$0xff]
      %v228 = vld [vmem:[%s184 + $0x8] sm:$0xff]
      %v229 = vld [vmem:[%s184 + $0x10] sm:$0xff]
      %v230 = vld [vmem:[%s184 + $0x18] sm:$0xff]
      %v263 = vunpack.c.l.b16 %v195
      %v264 = vunpack.c.l.b16 %v196
      %v265 = vunpack.c.l.b16 %v197
      %v266 = vunpack.c.l.b16 %v198
      %v267 = vunpack.c.l.b16 %v199
      %v268 = vunpack.c.l.b16 %v200
      %v269 = vunpack.c.l.b16 %v201
      %v270 = vunpack.c.l.b16 %v202
      %v271 = vunpack.c.l.b16 %v203
      %v272 = vunpack.c.l.b16 %v204
      %v273 = vunpack.c.l.b16 %v205
      %v274 = vunpack.c.l.b16 %v206
      %v275 = vunpack.c.l.b16 %v207
      %v276 = vunpack.c.l.b16 %v208
      %v277 = vunpack.c.l.b16 %v209
      %v278 = vunpack.c.l.b16 %v210
      %v279 = vunpack.c.l.b16 %v211
      %v280 = vunpack.c.l.b16 %v212
      %v281 = vunpack.c.l.b16 %v213
      %v282 = vunpack.c.l.b16 %v214
      %v283 = vunpack.c.l.b16 %v215
      %v284 = vunpack.c.l.b16 %v216
      %v285 = vunpack.c.l.b16 %v217
      %v286 = vunpack.c.l.b16 %v218
      %v287 = vunpack.c.l.b16 %v219
      %v288 = vunpack.c.l.b16 %v220
      %v289 = vunpack.c.l.b16 %v221
      %v290 = vunpack.c.l.b16 %v222
      %v291 = vunpack.c.l.b16 %v223
      %v292 = vunpack.c.l.b16 %v224
      %v293 = vunpack.c.l.b16 %v225
      %v294 = vunpack.c.l.b16 %v226
      %v295 = vpack.c.b16 %v264, %v263
      %v296 = vpack.c.b16 %v266, %v265
      %v297 = vpack.c.b16 %v268, %v267
      %v298 = vpack.c.b16 %v270, %v269
      %v299 = vpack.c.b16 %v272, %v271
      %v300 = vpack.c.b16 %v274, %v273
      %v301 = vpack.c.b16 %v276, %v275
      %v302 = vpack.c.b16 %v278, %v277
      %v303 = vpack.c.b16 %v280, %v279
      %v304 = vpack.c.b16 %v282, %v281
      %v305 = vpack.c.b16 %v284, %v283
      %v306 = vpack.c.b16 %v286, %v285
      %v307 = vpack.c.b16 %v288, %v287
      %v308 = vpack.c.b16 %v290, %v289
      %v309 = vpack.c.b16 %v292, %v291
      %v310 = vpack.c.b16 %v294, %v293
      %v315 = vunpack.c.l.b16 %v227
      %v316 = vunpack.c.h.b16 %v227
      %v317 = vunpack.c.l.b16 %v228
      %v318 = vunpack.c.h.b16 %v228
      %v319 = vunpack.c.l.b16 %v229
      %v320 = vunpack.c.h.b16 %v229
      %v321 = vunpack.c.l.b16 %v230
      %v322 = vunpack.c.h.b16 %v230
      %v323 = vpack.c.b16 %v317, %v315
      %v324 = vpack.c.b16 %v318, %v316
      %v325 = vpack.c.b16 %v321, %v319
      %v326 = vpack.c.b16 %v322, %v320
      %vm331 = vcmask 261120
      %v333 = vsel %vm331, %v295, 0
      %v336 = vsel %vm331, %v296, 0
      %v339 = vsel %vm331, %v297, 0
      %v342 = vsel %vm331, %v298, 0
      %v345 = vsel %vm331, %v299, 0
      %v348 = vsel %vm331, %v300, 0
      %v351 = vsel %vm331, %v301, 0
      %v354 = vsel %vm331, %v302, 0
      %v357 = vsel %vm331, %v303, 0
      %v360 = vsel %vm331, %v304, 0
      %v363 = vsel %vm331, %v305, 0
      %v366 = vsel %vm331, %v306, 0
      %v369 = vsel %vm331, %v307, 0
      %v372 = vsel %vm331, %v308, 0
      %v375 = vsel %vm331, %v309, 0
      %v378 = vsel %vm331, %v310, 0
      %380 = vmatprep.subr.bf16.mxu0 %v324
      %381 = vmatpush1.bf16.msra.mxu0 %v323
      %382 = vmatprep.subr.bf16.mxu0 %v326
      %383 = vmatpush1.bf16.msra.mxu0 %v325
      %384 = vmatprep.subr.bf16.mxu0 0
      %385 = vmatpush1.bf16.msra.mxu0 0
      %386 = vmatprep.subr.bf16.mxu0 0
      %387 = vmatpush1.bf16.msra.mxu0 0
      %388 = vmatprep.subr.bf16.mxu0 0
      %389 = vmatpush1.bf16.msra.mxu0 0
      %390 = vmatprep.subr.bf16.mxu0 0
      %391 = vmatpush1.bf16.msra.mxu0 0
      %392 = vmatprep.subr.bf16.mxu0 0
      %393 = vmatpush1.bf16.msra.mxu0 0
      %394 = vmatprep.subr.bf16.mxu0 0
      %395 = vmatpush1.bf16.msra.mxu0 0
      %396 = vmatprep.subr.bf16.mxu0 0
      %397 = vmatpush1.bf16.msra.mxu0 0
      %398 = vmatprep.subr.bf16.mxu0 0
      %399 = vmatpush1.bf16.msra.mxu0 0
      %400 = vmatprep.subr.bf16.mxu0 0
      %401 = vmatpush1.bf16.msra.mxu0 0
      %402 = vmatprep.subr.bf16.mxu0 0
      %403 = vmatpush1.bf16.msra.mxu0 0
      %404 = vmatprep.subr.bf16.mxu0 0
      %405 = vmatpush1.bf16.msra.mxu0 0
      %406 = vmatprep.subr.bf16.mxu0 0
      %407 = vmatpush1.bf16.msra.mxu0 0
      %408 = vmatprep.subr.bf16.mxu0 0
      %409 = vmatpush1.bf16.msra.mxu0 0
      %410 = vmatprep.subr.bf16.mxu0 0
      %411 = vmatpush1.bf16.msra.mxu0 0
      %412 = vmatprep.mubr.bf16.mxu0 0
      %413 = vmatmul.mubr.bf16.gmra.mrb[0].mxu0 %v333
      %v414 = vpop.f32.mrb[0].mxu0
      %v415 = vadd.f32 0.0, %v414
      %v416 = vpop.f32.mrb[0].mxu0
      %v417 = vadd.f32 0.0, %v416
      %v418 = vpop.f32.mrb[0].mxu0
      %v419 = vadd.f32 0.0, %v418
      %v420 = vpop.f32.mrb[0].mxu0
      %v421 = vadd.f32 0.0, %v420
      %422 = vmatprep.mubr.bf16.mxu0 0
      %423 = vmatmul.mubr.bf16.gmra.mrb[0].mxu0 %v336
      %v424 = vpop.f32.mrb[0].mxu0
      %v425 = vadd.f32 0.0, %v424
      %v426 = vpop.f32.mrb[0].mxu0
      %v427 = vadd.f32 0.0, %v426
      %v428 = vpop.f32.mrb[0].mxu0
      %v429 = vadd.f32 0.0, %v428
      %v430 = vpop.f32.mrb[0].mxu0
      %v431 = vadd.f32 0.0, %v430
      %432 = vmatprep.mubr.bf16.mxu0 0
      %433 = vmatmul.mubr.bf16.gmra.mrb[0].mxu0 %v339
      %v434 = vpop.f32.mrb[0].mxu0
      %v435 = vadd.f32 0.0, %v434
      %v436 = vpop.f32.mrb[0].mxu0
      %v437 = vadd.f32 0.0, %v436
      %v438 = vpop.f32.mrb[0].mxu0
      %v439 = vadd.f32 0.0, %v438
      %v440 = vpop.f32.mrb[0].mxu0
      %v441 = vadd.f32 0.0, %v440
      %442 = vmatprep.mubr.bf16.mxu0 0
      %443 = vmatmul.mubr.bf16.gmra.mrb[0].mxu0 %v342
      %v444 = vpop.f32.mrb[0].mxu0
      %v445 = vadd.f32 0.0, %v444
      %v446 = vpop.f32.mrb[0].mxu0
      %v447 = vadd.f32 0.0, %v446
      %v448 = vpop.f32.mrb[0].mxu0
      %v449 = vadd.f32 0.0, %v448
      %v450 = vpop.f32.mrb[0].mxu0
      %v451 = vadd.f32 0.0, %v450
      %452 = vmatprep.mubr.bf16.mxu0 0
      %453 = vmatmul.mubr.bf16.gmra.mrb[0].mxu0 %v345
      %v454 = vpop.f32.mrb[0].mxu0
      %v455 = vadd.f32 0.0, %v454
      %v456 = vpop.f32.mrb[0].mxu0
      %v457 = vadd.f32 0.0, %v456
      %v458 = vpop.f32.mrb[0].mxu0
      %v459 = vadd.f32 0.0, %v458
      %v460 = vpop.f32.mrb[0].mxu0
      %v461 = vadd.f32 0.0, %v460
      %462 = vmatprep.mubr.bf16.mxu0 0
      %463 = vmatmul.mubr.bf16.gmra.mrb[0].mxu0 %v348
      %v464 = vpop.f32.mrb[0].mxu0
      %v465 = vadd.f32 0.0, %v464
      %v466 = vpop.f32.mrb[0].mxu0
      %v467 = vadd.f32 0.0, %v466
      %v468 = vpop.f32.mrb[0].mxu0
      %v469 = vadd.f32 0.0, %v468
      %v470 = vpop.f32.mrb[0].mxu0
      %v471 = vadd.f32 0.0, %v470
      %472 = vmatprep.mubr.bf16.mxu0 0
      %473 = vmatmul.mubr.bf16.gmra.mrb[0].mxu0 %v351
      %v474 = vpop.f32.mrb[0].mxu0
      %v475 = vadd.f32 0.0, %v474
      %v476 = vpop.f32.mrb[0].mxu0
      %v477 = vadd.f32 0.0, %v476
      %v478 = vpop.f32.mrb[0].mxu0
      %v479 = vadd.f32 0.0, %v478
      %v480 = vpop.f32.mrb[0].mxu0
      %v481 = vadd.f32 0.0, %v480
      %482 = vmatprep.mubr.bf16.mxu0 0
      %483 = vmatmul.mubr.bf16.gmra.mrb[0].mxu0 %v354
      %v484 = vpop.f32.mrb[0].mxu0
      %v485 = vadd.f32 0.0, %v484
      %v486 = vpop.f32.mrb[0].mxu0
      %v487 = vadd.f32 0.0, %v486
      %v488 = vpop.f32.mrb[0].mxu0
      %v489 = vadd.f32 0.0, %v488
      %v490 = vpop.f32.mrb[0].mxu0
      %v491 = vadd.f32 0.0, %v490
      %492 = vmatprep.mubr.bf16.mxu0 0
      %493 = vmatmul.mubr.bf16.gmra.mrb[0].mxu0 %v357
      %v494 = vpop.f32.mrb[0].mxu0
      %v495 = vadd.f32 0.0, %v494
      %v496 = vpop.f32.mrb[0].mxu0
      %v497 = vadd.f32 0.0, %v496
      %v498 = vpop.f32.mrb[0].mxu0
      %v499 = vadd.f32 0.0, %v498
      %v500 = vpop.f32.mrb[0].mxu0
      %v501 = vadd.f32 0.0, %v500
      %502 = vmatprep.mubr.bf16.mxu0 0
      %503 = vmatmul.mubr.bf16.gmra.mrb[0].mxu0 %v360
      %v504 = vpop.f32.mrb[0].mxu0
      %v505 = vadd.f32 0.0, %v504
      %v506 = vpop.f32.mrb[0].mxu0
      %v507 = vadd.f32 0.0, %v506
      %v508 = vpop.f32.mrb[0].mxu0
      %v509 = vadd.f32 0.0, %v508
      %v510 = vpop.f32.mrb[0].mxu0
      %v511 = vadd.f32 0.0, %v510
      %512 = vmatprep.mubr.bf16.mxu0 0
      %513 = vmatmul.mubr.bf16.gmra.mrb[0].mxu0 %v363
      %v514 = vpop.f32.mrb[0].mxu0
      %v515 = vadd.f32 0.0, %v514
      %v516 = vpop.f32.mrb[0].mxu0
      %v517 = vadd.f32 0.0, %v516
      %v518 = vpop.f32.mrb[0].mxu0
      %v519 = vadd.f32 0.0, %v518
      %v520 = vpop.f32.mrb[0].mxu0
      %v521 = vadd.f32 0.0, %v520
      %522 = vmatprep.mubr.bf16.mxu0 0
      %523 = vmatmul.mubr.bf16.gmra.mrb[0].mxu0 %v366
      %v524 = vpop.f32.mrb[0].mxu0
      %v525 = vadd.f32 0.0, %v524
      %v526 = vpop.f32.mrb[0].mxu0
      %v527 = vadd.f32 0.0, %v526
      %v528 = vpop.f32.mrb[0].mxu0
      %v529 = vadd.f32 0.0, %v528
      %v530 = vpop.f32.mrb[0].mxu0
      %v531 = vadd.f32 0.0, %v530
      %532 = vmatprep.mubr.bf16.mxu0 0
      %533 = vmatmul.mubr.bf16.gmra.mrb[0].mxu0 %v369
      %v534 = vpop.f32.mrb[0].mxu0
      %v535 = vadd.f32 0.0, %v534
      %v536 = vpop.f32.mrb[0].mxu0
      %v537 = vadd.f32 0.0, %v536
      %v538 = vpop.f32.mrb[0].mxu0
      %v539 = vadd.f32 0.0, %v538
      %v540 = vpop.f32.mrb[0].mxu0
      %v541 = vadd.f32 0.0, %v540
      %542 = vmatprep.mubr.bf16.mxu0 0
      %543 = vmatmul.mubr.bf16.gmra.mrb[0].mxu0 %v372
      %v544 = vpop.f32.mrb[0].mxu0
      %v545 = vadd.f32 0.0, %v544
      %v546 = vpop.f32.mrb[0].mxu0
      %v547 = vadd.f32 0.0, %v546
      %v548 = vpop.f32.mrb[0].mxu0
      %v549 = vadd.f32 0.0, %v548
      %v550 = vpop.f32.mrb[0].mxu0
      %v551 = vadd.f32 0.0, %v550
      %552 = vmatprep.mubr.bf16.mxu0 0
      %553 = vmatmul.mubr.bf16.gmra.mrb[0].mxu0 %v375
      %v554 = vpop.f32.mrb[0].mxu0
      %v555 = vadd.f32 0.0, %v554
      %v556 = vpop.f32.mrb[0].mxu0
      %v557 = vadd.f32 0.0, %v556
      %v558 = vpop.f32.mrb[0].mxu0
      %v559 = vadd.f32 0.0, %v558
      %v560 = vpop.f32.mrb[0].mxu0
      %v561 = vadd.f32 0.0, %v560
      %562 = vmatprep.mubr.bf16.mxu0 0
      %563 = vmatmul.mubr.bf16.gmra.mrb[0].mxu0 %v378
      %v564 = vpop.f32.mrb[0].mxu0
      %v565 = vadd.f32 0.0, %v564
      %v566 = vpop.f32.mrb[0].mxu0
      %v567 = vadd.f32 0.0, %v566
      %v568 = vpop.f32.mrb[0].mxu0
      %v569 = vadd.f32 0.0, %v568
      %v570 = vpop.f32.mrb[0].mxu0
      %v571 = vadd.f32 0.0, %v570
      %572 = vdwg.mxu0
      %v573 = vmax.f32 %v415, %v417
      %574 = vmax.xlane.f32.xlu0 %v573
      %v575 = vpop.xlane.xlu0 %574
      %v576 = vmax.f32 %v419, %v421
      %577 = vmax.xlane.f32.xlu0 %v576
      %v578 = vpop.xlane.xlu0 %577
      %v579 = vmax.f32 %v425, %v427
      %580 = vmax.xlane.f32.xlu0 %v579
      %v581 = vpop.xlane.xlu0 %580
      %v582 = vmax.f32 %v429, %v431
      %583 = vmax.xlane.f32.xlu0 %v582
      %v584 = vpop.xlane.xlu0 %583
      %v585 = vmax.f32 %v435, %v437
      %586 = vmax.xlane.f32.xlu0 %v585
      %v587 = vpop.xlane.xlu0 %586
      %v588 = vmax.f32 %v439, %v441
      %589 = vmax.xlane.f32.xlu0 %v588
      %v590 = vpop.xlane.xlu0 %589
      %v591 = vmax.f32 %v445, %v447
      %592 = vmax.xlane.f32.xlu0 %v591
      %v593 = vpop.xlane.xlu0 %592
      %v594 = vmax.f32 %v449, %v451
      %595 = vmax.xlane.f32.xlu0 %v594
      %v596 = vpop.xlane.xlu0 %595
      %v597 = vmax.f32 %v455, %v457
      %598 = vmax.xlane.f32.xlu0 %v597
      %v599 = vpop.xlane.xlu0 %598
      %v600 = vmax.f32 %v459, %v461
      %601 = vmax.xlane.f32.xlu0 %v600
      %v602 = vpop.xlane.xlu0 %601
      %v603 = vmax.f32 %v465, %v467
      %604 = vmax.xlane.f32.xlu0 %v603
      %v605 = vpop.xlane.xlu0 %604
      %v606 = vmax.f32 %v469, %v471
      %607 = vmax.xlane.f32.xlu0 %v606
      %v608 = vpop.xlane.xlu0 %607
      %v609 = vmax.f32 %v475, %v477
      %610 = vmax.xlane.f32.xlu0 %v609
      %v611 = vpop.xlane.xlu0 %610
      %v612 = vmax.f32 %v479, %v481
      %613 = vmax.xlane.f32.xlu0 %v612
      %v614 = vpop.xlane.xlu0 %613
      %v615 = vmax.f32 %v485, %v487
      %616 = vmax.xlane.f32.xlu0 %v615
      %v617 = vpop.xlane.xlu0 %616
      %v618 = vmax.f32 %v489, %v491
      %619 = vmax.xlane.f32.xlu0 %v618
      %v620 = vpop.xlane.xlu0 %619
      %v621 = vmax.f32 %v495, %v497
      %622 = vmax.xlane.f32.xlu0 %v621
      %v623 = vpop.xlane.xlu0 %622
      %v624 = vmax.f32 %v499, %v501
      %625 = vmax.xlane.f32.xlu0 %v624
      %v626 = vpop.xlane.xlu0 %625
      %v627 = vmax.f32 %v505, %v507
      %628 = vmax.xlane.f32.xlu0 %v627
      %v629 = vpop.xlane.xlu0 %628
      %v630 = vmax.f32 %v509, %v511
      %631 = vmax.xlane.f32.xlu0 %v630
      %v632 = vpop.xlane.xlu0 %631
      %v633 = vmax.f32 %v515, %v517
      %634 = vmax.xlane.f32.xlu0 %v633
      %v635 = vpop.xlane.xlu0 %634
      %v636 = vmax.f32 %v519, %v521
      %637 = vmax.xlane.f32.xlu0 %v636
      %v638 = vpop.xlane.xlu0 %637
      %v639 = vmax.f32 %v525, %v527
      %640 = vmax.xlane.f32.xlu0 %v639
      %v641 = vpop.xlane.xlu0 %640
      %v642 = vmax.f32 %v529, %v531
      %643 = vmax.xlane.f32.xlu0 %v642
      %v644 = vpop.xlane.xlu0 %643
      %v645 = vmax.f32 %v535, %v537
      %646 = vmax.xlane.f32.xlu0 %v645
      %v647 = vpop.xlane.xlu0 %646
      %v648 = vmax.f32 %v539, %v541
      %649 = vmax.xlane.f32.xlu0 %v648
      %v650 = vpop.xlane.xlu0 %649
      %v651 = vmax.f32 %v545, %v547
      %652 = vmax.xlane.f32.xlu0 %v651
      %v653 = vpop.xlane.xlu0 %652
      %v654 = vmax.f32 %v549, %v551
      %655 = vmax.xlane.f32.xlu0 %v654
      %v656 = vpop.xlane.xlu0 %655
      %v657 = vmax.f32 %v555, %v557
      %658 = vmax.xlane.f32.xlu0 %v657
      %v659 = vpop.xlane.xlu0 %658
      %v660 = vmax.f32 %v559, %v561
      %661 = vmax.xlane.f32.xlu0 %v660
      %v662 = vpop.xlane.xlu0 %661
      %v663 = vmax.f32 %v565, %v567
      %664 = vmax.xlane.f32.xlu0 %v663
      %v665 = vpop.xlane.xlu0 %664
      %v666 = vmax.f32 %v569, %v571
      %667 = vmax.xlane.f32.xlu0 %v666
      %v668 = vpop.xlane.xlu0 %667
      %v669 = vsub.f32 1.0, %v575
      %v670 = vsub.f32 1.0, %v578
      %v671 = vsub.f32 1.0, %v581
      %v672 = vsub.f32 1.0, %v584
      %v673 = vsub.f32 1.0, %v587
      %v674 = vsub.f32 1.0, %v590
      %v675 = vsub.f32 1.0, %v593
      %v676 = vsub.f32 1.0, %v596
      %v677 = vsub.f32 1.0, %v599
      %v678 = vsub.f32 1.0, %v602
      %v679 = vsub.f32 1.0, %v605
      %v680 = vsub.f32 1.0, %v608
      %v681 = vsub.f32 1.0, %v611
      %v682 = vsub.f32 1.0, %v614
      %v683 = vsub.f32 1.0, %v617
      %v684 = vsub.f32 1.0, %v620
      %v685 = vsub.f32 1.0, %v623
      %v686 = vsub.f32 1.0, %v626
      %v687 = vsub.f32 1.0, %v629
      %v688 = vsub.f32 1.0, %v632
      %v689 = vsub.f32 1.0, %v635
      %v690 = vsub.f32 1.0, %v638
      %v691 = vsub.f32 1.0, %v641
      %v692 = vsub.f32 1.0, %v644
      %v693 = vsub.f32 1.0, %v647
      %v694 = vsub.f32 1.0, %v650
      %v695 = vsub.f32 1.0, %v653
      %v696 = vsub.f32 1.0, %v656
      %v697 = vsub.f32 1.0, %v659
      %v698 = vsub.f32 1.0, %v662
      %v699 = vsub.f32 1.0, %v665
      %v700 = vsub.f32 1.0, %v668
      %v701 = vmax.f32 %v669, 0.0
      %v702 = vmax.f32 %v670, 0.0
      %v703 = vmax.f32 %v671, 0.0
      %v704 = vmax.f32 %v672, 0.0
      %v705 = vmax.f32 %v673, 0.0
      %v706 = vmax.f32 %v674, 0.0
      %v707 = vmax.f32 %v675, 0.0
      %v708 = vmax.f32 %v676, 0.0
      %v709 = vmax.f32 %v677, 0.0
      %v710 = vmax.f32 %v678, 0.0
      %v711 = vmax.f32 %v679, 0.0
      %v712 = vmax.f32 %v680, 0.0
      %v713 = vmax.f32 %v681, 0.0
      %v714 = vmax.f32 %v682, 0.0
      %v715 = vmax.f32 %v683, 0.0
      %v716 = vmax.f32 %v684, 0.0
      %v717 = vmax.f32 %v685, 0.0
      %v718 = vmax.f32 %v686, 0.0
      %v719 = vmax.f32 %v687, 0.0
      %v720 = vmax.f32 %v688, 0.0
      %v721 = vmax.f32 %v689, 0.0
      %v722 = vmax.f32 %v690, 0.0
      %v723 = vmax.f32 %v691, 0.0
      %v724 = vmax.f32 %v692, 0.0
      %v725 = vmax.f32 %v693, 0.0
      %v726 = vmax.f32 %v694, 0.0
      %v727 = vmax.f32 %v695, 0.0
      %v728 = vmax.f32 %v696, 0.0
      %v729 = vmax.f32 %v697, 0.0
      %v730 = vmax.f32 %v698, 0.0
      %v731 = vmax.f32 %v699, 0.0
      %v732 = vmax.f32 %v700, 0.0
      %v733 = vadd.f32 %v701, 1e-05
      %v734 = vadd.f32 %v702, 1e-05
      %v735 = vadd.f32 %v703, 1e-05
      %v736 = vadd.f32 %v704, 1e-05
      %v737 = vadd.f32 %v705, 1e-05
      %v738 = vadd.f32 %v706, 1e-05
      %v739 = vadd.f32 %v707, 1e-05
      %v740 = vadd.f32 %v708, 1e-05
      %v741 = vadd.f32 %v709, 1e-05
      %v742 = vadd.f32 %v710, 1e-05
      %v743 = vadd.f32 %v711, 1e-05
      %v744 = vadd.f32 %v712, 1e-05
      %v745 = vadd.f32 %v713, 1e-05
      %v746 = vadd.f32 %v714, 1e-05
      %v747 = vadd.f32 %v715, 1e-05
      %v748 = vadd.f32 %v716, 1e-05
      %v749 = vadd.f32 %v717, 1e-05
      %v750 = vadd.f32 %v718, 1e-05
      %v751 = vadd.f32 %v719, 1e-05
      %v752 = vadd.f32 %v720, 1e-05
      %v753 = vadd.f32 %v721, 1e-05
      %v754 = vadd.f32 %v722, 1e-05
      %v755 = vadd.f32 %v723, 1e-05
      %v756 = vadd.f32 %v724, 1e-05
      %v757 = vadd.f32 %v725, 1e-05
      %v758 = vadd.f32 %v726, 1e-05
      %v759 = vadd.f32 %v727, 1e-05
      %v760 = vadd.f32 %v728, 1e-05
      %v761 = vadd.f32 %v729, 1e-05
      %v762 = vadd.f32 %v730, 1e-05
      %v763 = vadd.f32 %v731, 1e-05
      %v764 = vadd.f32 %v732, 1e-05
      %v765 = vrcp.pop %v733
      %v766 = vmul.f32 2.0, %v765
      %v767 = vrcp.pop %v734
      %v768 = vmul.f32 2.0, %v767
      %v769 = vrcp.pop %v735
      %v770 = vmul.f32 2.0, %v769
      %v771 = vrcp.pop %v736
      %v772 = vmul.f32 2.0, %v771
      %v773 = vrcp.pop %v737
      %v774 = vmul.f32 2.0, %v773
      %v775 = vrcp.pop %v738
      %v776 = vmul.f32 2.0, %v775
      %v777 = vrcp.pop %v739
      %v778 = vmul.f32 2.0, %v777
      %v779 = vrcp.pop %v740
      %v780 = vmul.f32 2.0, %v779
      %v781 = vrcp.pop %v741
      %v782 = vmul.f32 2.0, %v781
      %v783 = vrcp.pop %v742
      %v784 = vmul.f32 2.0, %v783
      %v785 = vrcp.pop %v743
      %v786 = vmul.f32 2.0, %v785
      %v787 = vrcp.pop %v744
      %v788 = vmul.f32 2.0, %v787
      %v789 = vrcp.pop %v745
      %v790 = vmul.f32 2.0, %v789
      %v791 = vrcp.pop %v746
      %v792 = vmul.f32 2.0, %v791
      %v793 = vrcp.pop %v747
      %v794 = vmul.f32 2.0, %v793
      %v795 = vrcp.pop %v748
      %v796 = vmul.f32 2.0, %v795
      %v797 = vrcp.pop %v749
      %v798 = vmul.f32 2.0, %v797
      %v799 = vrcp.pop %v750
      %v800 = vmul.f32 2.0, %v799
      %v801 = vrcp.pop %v751
      %v802 = vmul.f32 2.0, %v801
      %v803 = vrcp.pop %v752
      %v804 = vmul.f32 2.0, %v803
      %v805 = vrcp.pop %v753
      %v806 = vmul.f32 2.0, %v805
      %v807 = vrcp.pop %v754
      %v808 = vmul.f32 2.0, %v807
      %v809 = vrcp.pop %v755
      %v810 = vmul.f32 2.0, %v809
      %v811 = vrcp.pop %v756
      %v812 = vmul.f32 2.0, %v811
      %v813 = vrcp.pop %v757
      %v814 = vmul.f32 2.0, %v813
      %v815 = vrcp.pop %v758
      %v816 = vmul.f32 2.0, %v815
      %v817 = vrcp.pop %v759
      %v818 = vmul.f32 2.0, %v817
      %v819 = vrcp.pop %v760
      %v820 = vmul.f32 2.0, %v819
      %v821 = vrcp.pop %v761
      %v822 = vmul.f32 2.0, %v821
      %v823 = vrcp.pop %v762
      %v824 = vmul.f32 2.0, %v823
      %v825 = vrcp.pop %v763
      %v826 = vmul.f32 2.0, %v825
      %v827 = vrcp.pop %v764
      %v828 = vmul.f32 2.0, %v827
      %v829 = vsub.f32 %v415, %v575
      %v830 = vsub.f32 %v417, %v575
      %v831 = vsub.f32 %v419, %v578
      %v832 = vsub.f32 %v421, %v578
      %v833 = vsub.f32 %v425, %v581
      %v834 = vsub.f32 %v427, %v581
      %v835 = vsub.f32 %v429, %v584
      %v836 = vsub.f32 %v431, %v584
      %v837 = vsub.f32 %v435, %v587
      %v838 = vsub.f32 %v437, %v587
      %v839 = vsub.f32 %v439, %v590
      %v840 = vsub.f32 %v441, %v590
      %v841 = vsub.f32 %v445, %v593
      %v842 = vsub.f32 %v447, %v593
      %v843 = vsub.f32 %v449, %v596
      %v844 = vsub.f32 %v451, %v596
      %v845 = vsub.f32 %v455, %v599
      %v846 = vsub.f32 %v457, %v599
      %v847 = vsub.f32 %v459, %v602
      %v848 = vsub.f32 %v461, %v602
      %v849 = vsub.f32 %v465, %v605
      %v850 = vsub.f32 %v467, %v605
      %v851 = vsub.f32 %v469, %v608
      %v852 = vsub.f32 %v471, %v608
      %v853 = vsub.f32 %v475, %v611
      %v854 = vsub.f32 %v477, %v611
      %v855 = vsub.f32 %v479, %v614
      %v856 = vsub.f32 %v481, %v614
      %v857 = vsub.f32 %v485, %v617
      %v858 = vsub.f32 %v487, %v617
      %v859 = vsub.f32 %v489, %v620
      %v860 = vsub.f32 %v491, %v620
      %v861 = vsub.f32 %v495, %v623
      %v862 = vsub.f32 %v497, %v623
      %v863 = vsub.f32 %v499, %v626
      %v864 = vsub.f32 %v501, %v626
      %v865 = vsub.f32 %v505, %v629
      %v866 = vsub.f32 %v507, %v629
      %v867 = vsub.f32 %v509, %v632
      %v868 = vsub.f32 %v511, %v632
      %v869 = vsub.f32 %v515, %v635
      %v870 = vsub.f32 %v517, %v635
      %v871 = vsub.f32 %v519, %v638
      %v872 = vsub.f32 %v521, %v638
      %v873 = vsub.f32 %v525, %v641
      %v874 = vsub.f32 %v527, %v641
      %v875 = vsub.f32 %v529, %v644
      %v876 = vsub.f32 %v531, %v644
      %v877 = vsub.f32 %v535, %v647
      %v878 = vsub.f32 %v537, %v647
      %v879 = vsub.f32 %v539, %v650
      %v880 = vsub.f32 %v541, %v650
      %v881 = vsub.f32 %v545, %v653
      %v882 = vsub.f32 %v547, %v653
      %v883 = vsub.f32 %v549, %v656
      %v884 = vsub.f32 %v551, %v656
      %v885 = vsub.f32 %v555, %v659
      %v886 = vsub.f32 %v557, %v659
      %v887 = vsub.f32 %v559, %v662
      %v888 = vsub.f32 %v561, %v662
      %v889 = vsub.f32 %v565, %v665
      %v890 = vsub.f32 %v567, %v665
      %v891 = vsub.f32 %v569, %v668
      %v892 = vsub.f32 %v571, %v668
      %v893 = vmul.f32 %v766, %v829
      %v894 = vmul.f32 %v766, %v830
      %v895 = vmul.f32 %v768, %v831
      %v896 = vmul.f32 %v768, %v832
      %v897 = vmul.f32 %v770, %v833
      %v898 = vmul.f32 %v770, %v834
      %v899 = vmul.f32 %v772, %v835
      %v900 = vmul.f32 %v772, %v836
      %v901 = vmul.f32 %v774, %v837
      %v902 = vmul.f32 %v774, %v838
      %v903 = vmul.f32 %v776, %v839
      %v904 = vmul.f32 %v776, %v840
      %v905 = vmul.f32 %v778, %v841
      %v906 = vmul.f32 %v778, %v842
      %v907 = vmul.f32 %v780, %v843
      %v908 = vmul.f32 %v780, %v844
      %v909 = vmul.f32 %v782, %v845
      %v910 = vmul.f32 %v782, %v846
      %v911 = vmul.f32 %v784, %v847
      %v912 = vmul.f32 %v784, %v848
      %v913 = vmul.f32 %v786, %v849
      %v914 = vmul.f32 %v786, %v850
      %v915 = vmul.f32 %v788, %v851
      %v916 = vmul.f32 %v788, %v852
      %v917 = vmul.f32 %v790, %v853
      %v918 = vmul.f32 %v790, %v854
      %v919 = vmul.f32 %v792, %v855
      %v920 = vmul.f32 %v792, %v856
      %v921 = vmul.f32 %v794, %v857
      %v922 = vmul.f32 %v794, %v858
      %v923 = vmul.f32 %v796, %v859
      %v924 = vmul.f32 %v796, %v860
      %v925 = vmul.f32 %v798, %v861
      %v926 = vmul.f32 %v798, %v862
      %v927 = vmul.f32 %v800, %v863
      %v928 = vmul.f32 %v800, %v864
      %v929 = vmul.f32 %v802, %v865
      %v930 = vmul.f32 %v802, %v866
      %v931 = vmul.f32 %v804, %v867
      %v932 = vmul.f32 %v804, %v868
      %v933 = vmul.f32 %v806, %v869
      %v934 = vmul.f32 %v806, %v870
      %v935 = vmul.f32 %v808, %v871
      %v936 = vmul.f32 %v808, %v872
      %v937 = vmul.f32 %v810, %v873
      %v938 = vmul.f32 %v810, %v874
      %v939 = vmul.f32 %v812, %v875
      %v940 = vmul.f32 %v812, %v876
      %v941 = vmul.f32 %v814, %v877
      %v942 = vmul.f32 %v814, %v878
      %v943 = vmul.f32 %v816, %v879
      %v944 = vmul.f32 %v816, %v880
      %v945 = vmul.f32 %v818, %v881
      %v946 = vmul.f32 %v818, %v882
      %v947 = vmul.f32 %v820, %v883
      %v948 = vmul.f32 %v820, %v884
      %v949 = vmul.f32 %v822, %v885
      %v950 = vmul.f32 %v822, %v886
      %v951 = vmul.f32 %v824, %v887
      %v952 = vmul.f32 %v824, %v888
      %v953 = vmul.f32 %v826, %v889
      %v954 = vmul.f32 %v826, %v890
      %v955 = vmul.f32 %v828, %v891
      %v956 = vmul.f32 %v828, %v892
      %v957 = vmul.f32 %v893, 1.442695
      %v958 = vpow.pop %v957
      %v959 = vmul.f32 %v894, 1.442695
      %v960 = vpow.pop %v959
      %v961 = vmul.f32 %v895, 1.442695
      %v962 = vpow.pop %v961
      %v963 = vmul.f32 %v896, 1.442695
      %v964 = vpow.pop %v963
      %v965 = vmul.f32 %v897, 1.442695
      %v966 = vpow.pop %v965
      %v967 = vmul.f32 %v898, 1.442695
      %v968 = vpow.pop %v967
      %v969 = vmul.f32 %v899, 1.442695
      %v970 = vpow.pop %v969
      %v971 = vmul.f32 %v900, 1.442695
      %v972 = vpow.pop %v971
      %v973 = vmul.f32 %v901, 1.442695
      %v974 = vpow.pop %v973
      %v975 = vmul.f32 %v902, 1.442695
      %v976 = vpow.pop %v975
      %v977 = vmul.f32 %v903, 1.442695
      %v978 = vpow.pop %v977
      %v979 = vmul.f32 %v904, 1.442695
      %v980 = vpow.pop %v979
      %v981 = vmul.f32 %v905, 1.442695
      %v982 = vpow.pop %v981
      %v983 = vmul.f32 %v906, 1.442695
      %v984 = vpow.pop %v983
      %v985 = vmul.f32 %v907, 1.442695
      %v986 = vpow.pop %v985
      %v987 = vmul.f32 %v908, 1.442695
      %v988 = vpow.pop %v987
      %v989 = vmul.f32 %v909, 1.442695
      %v990 = vpow.pop %v989
      %v991 = vmul.f32 %v910, 1.442695
      %v992 = vpow.pop %v991
      %v993 = vmul.f32 %v911, 1.442695
      %v994 = vpow.pop %v993
      %v995 = vmul.f32 %v912, 1.442695
      %v996 = vpow.pop %v995
      %v997 = vmul.f32 %v913, 1.442695
      %v998 = vpow.pop %v997
      %v999 = vmul.f32 %v914, 1.442695
      %v1000 = vpow.pop %v999
      %v1001 = vmul.f32 %v915, 1.442695
      %v1002 = vpow.pop %v1001
      %v1003 = vmul.f32 %v916, 1.442695
      %v1004 = vpow.pop %v1003
      %v1005 = vmul.f32 %v917, 1.442695
      %v1006 = vpow.pop %v1005
      %v1007 = vmul.f32 %v918, 1.442695
      %v1008 = vpow.pop %v1007
      %v1009 = vmul.f32 %v919, 1.442695
      %v1010 = vpow.pop %v1009
      %v1011 = vmul.f32 %v920, 1.442695
      %v1012 = vpow.pop %v1011
      %v1013 = vmul.f32 %v921, 1.442695
      %v1014 = vpow.pop %v1013
      %v1015 = vmul.f32 %v922, 1.442695
      %v1016 = vpow.pop %v1015
      %v1017 = vmul.f32 %v923, 1.442695
      %v1018 = vpow.pop %v1017
      %v1019 = vmul.f32 %v924, 1.442695
      %v1020 = vpow.pop %v1019
      %v1021 = vmul.f32 %v925, 1.442695
      %v1022 = vpow.pop %v1021
      %v1023 = vmul.f32 %v926, 1.442695
      %v1024 = vpow.pop %v1023
      %v1025 = vmul.f32 %v927, 1.442695
      %v1026 = vpow.pop %v1025
      %v1027 = vmul.f32 %v928, 1.442695
      %v1028 = vpow.pop %v1027
      %v1029 = vmul.f32 %v929, 1.442695
      %v1030 = vpow.pop %v1029
      %v1031 = vmul.f32 %v930, 1.442695
      %v1032 = vpow.pop %v1031
      %v1033 = vmul.f32 %v931, 1.442695
      %v1034 = vpow.pop %v1033
      %v1035 = vmul.f32 %v932, 1.442695
      %v1036 = vpow.pop %v1035
      %v1037 = vmul.f32 %v933, 1.442695
      %v1038 = vpow.pop %v1037
      %v1039 = vmul.f32 %v934, 1.442695
      %v1040 = vpow.pop %v1039
      %v1041 = vmul.f32 %v935, 1.442695
      %v1042 = vpow.pop %v1041
      %v1043 = vmul.f32 %v936, 1.442695
      %v1044 = vpow.pop %v1043
      %v1045 = vmul.f32 %v937, 1.442695
      %v1046 = vpow.pop %v1045
      %v1047 = vmul.f32 %v938, 1.442695
      %v1048 = vpow.pop %v1047
      %v1049 = vmul.f32 %v939, 1.442695
      %v1050 = vpow.pop %v1049
      %v1051 = vmul.f32 %v940, 1.442695
      %v1052 = vpow.pop %v1051
      %v1053 = vmul.f32 %v941, 1.442695
      %v1054 = vpow.pop %v1053
      %v1055 = vmul.f32 %v942, 1.442695
      %v1056 = vpow.pop %v1055
      %v1057 = vmul.f32 %v943, 1.442695
      %v1058 = vpow.pop %v1057
      %v1059 = vmul.f32 %v944, 1.442695
      %v1060 = vpow.pop %v1059
      %v1061 = vmul.f32 %v945, 1.442695
      %v1062 = vpow.pop %v1061
      %v1063 = vmul.f32 %v946, 1.442695
      %v1064 = vpow.pop %v1063
      %v1065 = vmul.f32 %v947, 1.442695
      %v1066 = vpow.pop %v1065
      %v1067 = vmul.f32 %v948, 1.442695
      %v1068 = vpow.pop %v1067
      %v1069 = vmul.f32 %v949, 1.442695
      %v1070 = vpow.pop %v1069
      %v1071 = vmul.f32 %v950, 1.442695
      %v1072 = vpow.pop %v1071
      %v1073 = vmul.f32 %v951, 1.442695
      %v1074 = vpow.pop %v1073
      %v1075 = vmul.f32 %v952, 1.442695
      %v1076 = vpow.pop %v1075
      %v1077 = vmul.f32 %v953, 1.442695
      %v1078 = vpow.pop %v1077
      %v1079 = vmul.f32 %v954, 1.442695
      %v1080 = vpow.pop %v1079
      %v1081 = vmul.f32 %v955, 1.442695
      %v1082 = vpow.pop %v1081
      %v1083 = vmul.f32 %v956, 1.442695
      %v1084 = vpow.pop %v1083
      %v1085 = vadd.f32 %v958, %v960
      %1086 = vadd.xlane.f32.xlu0 %v1085
      %v1087 = vpop.xlane.xlu0 %1086
      %v1088 = vadd.f32 %v962, %v964
      %1089 = vadd.xlane.f32.xlu0 %v1088
      %v1090 = vpop.xlane.xlu0 %1089
      %v1091 = vadd.f32 %v966, %v968
      %1092 = vadd.xlane.f32.xlu0 %v1091
      %v1093 = vpop.xlane.xlu0 %1092
      %v1094 = vadd.f32 %v970, %v972
      %1095 = vadd.xlane.f32.xlu0 %v1094
      %v1096 = vpop.xlane.xlu0 %1095
      %v1097 = vadd.f32 %v974, %v976
      %1098 = vadd.xlane.f32.xlu0 %v1097
      %v1099 = vpop.xlane.xlu0 %1098
      %v1100 = vadd.f32 %v978, %v980
      %1101 = vadd.xlane.f32.xlu0 %v1100
      %v1102 = vpop.xlane.xlu0 %1101
      %v1103 = vadd.f32 %v982, %v984
      %1104 = vadd.xlane.f32.xlu0 %v1103
      %v1105 = vpop.xlane.xlu0 %1104
      %v1106 = vadd.f32 %v986, %v988
      %1107 = vadd.xlane.f32.xlu0 %v1106
      %v1108 = vpop.xlane.xlu0 %1107
      %v1109 = vadd.f32 %v990, %v992
      %1110 = vadd.xlane.f32.xlu0 %v1109
      %v1111 = vpop.xlane.xlu0 %1110
      %v1112 = vadd.f32 %v994, %v996
      %1113 = vadd.xlane.f32.xlu0 %v1112
      %v1114 = vpop.xlane.xlu0 %1113
      %v1115 = vadd.f32 %v998, %v1000
      %1116 = vadd.xlane.f32.xlu0 %v1115
      %v1117 = vpop.xlane.xlu0 %1116
      %v1118 = vadd.f32 %v1002, %v1004
      %1119 = vadd.xlane.f32.xlu0 %v1118
      %v1120 = vpop.xlane.xlu0 %1119
      %v1121 = vadd.f32 %v1006, %v1008
      %1122 = vadd.xlane.f32.xlu0 %v1121
      %v1123 = vpop.xlane.xlu0 %1122
      %v1124 = vadd.f32 %v1010, %v1012
      %1125 = vadd.xlane.f32.xlu0 %v1124
      %v1126 = vpop.xlane.xlu0 %1125
      %v1127 = vadd.f32 %v1014, %v1016
      %1128 = vadd.xlane.f32.xlu0 %v1127
      %v1129 = vpop.xlane.xlu0 %1128
      %v1130 = vadd.f32 %v1018, %v1020
      %1131 = vadd.xlane.f32.xlu0 %v1130
      %v1132 = vpop.xlane.xlu0 %1131
      %v1133 = vadd.f32 %v1022, %v1024
      %1134 = vadd.xlane.f32.xlu0 %v1133
      %v1135 = vpop.xlane.xlu0 %1134
      %v1136 = vadd.f32 %v1026, %v1028
      %1137 = vadd.xlane.f32.xlu0 %v1136
      %v1138 = vpop.xlane.xlu0 %1137
      %v1139 = vadd.f32 %v1030, %v1032
      %1140 = vadd.xlane.f32.xlu0 %v1139
      %v1141 = vpop.xlane.xlu0 %1140
      %v1142 = vadd.f32 %v1034, %v1036
      %1143 = vadd.xlane.f32.xlu0 %v1142
      %v1144 = vpop.xlane.xlu0 %1143
      %v1145 = vadd.f32 %v1038, %v1040
      %1146 = vadd.xlane.f32.xlu0 %v1145
      %v1147 = vpop.xlane.xlu0 %1146
      %v1148 = vadd.f32 %v1042, %v1044
      %1149 = vadd.xlane.f32.xlu0 %v1148
      %v1150 = vpop.xlane.xlu0 %1149
      %v1151 = vadd.f32 %v1046, %v1048
      %1152 = vadd.xlane.f32.xlu0 %v1151
      %v1153 = vpop.xlane.xlu0 %1152
      %v1154 = vadd.f32 %v1050, %v1052
      %1155 = vadd.xlane.f32.xlu0 %v1154
      %v1156 = vpop.xlane.xlu0 %1155
      %v1157 = vadd.f32 %v1054, %v1056
      %1158 = vadd.xlane.f32.xlu0 %v1157
      %v1159 = vpop.xlane.xlu0 %1158
      %v1160 = vadd.f32 %v1058, %v1060
      %1161 = vadd.xlane.f32.xlu0 %v1160
      %v1162 = vpop.xlane.xlu0 %1161
      %v1163 = vadd.f32 %v1062, %v1064
      %1164 = vadd.xlane.f32.xlu0 %v1163
      %v1165 = vpop.xlane.xlu0 %1164
      %v1166 = vadd.f32 %v1066, %v1068
      %1167 = vadd.xlane.f32.xlu0 %v1166
      %v1168 = vpop.xlane.xlu0 %1167
      %v1169 = vadd.f32 %v1070, %v1072
      %1170 = vadd.xlane.f32.xlu0 %v1169
      %v1171 = vpop.xlane.xlu0 %1170
      %v1172 = vadd.f32 %v1074, %v1076
      %1173 = vadd.xlane.f32.xlu0 %v1172
      %v1174 = vpop.xlane.xlu0 %1173
      %v1175 = vadd.f32 %v1078, %v1080
      %1176 = vadd.xlane.f32.xlu0 %v1175
      %v1177 = vpop.xlane.xlu0 %1176
      %v1178 = vadd.f32 %v1082, %v1084
      %1179 = vadd.xlane.f32.xlu0 %v1178
      %v1180 = vpop.xlane.xlu0 %1179
      %v1181 = vrcp.pop %v1087
      %v1182 = vmul.f32 1.0, %v1181
      %v1183 = vrcp.pop %v1090
      %v1184 = vmul.f32 1.0, %v1183
      %v1185 = vrcp.pop %v1093
      %v1186 = vmul.f32 1.0, %v1185
      %v1187 = vrcp.pop %v1096
      %v1188 = vmul.f32 1.0, %v1187
      %v1189 = vrcp.pop %v1099
      %v1190 = vmul.f32 1.0, %v1189
      %v1191 = vrcp.pop %v1102
      %v1192 = vmul.f32 1.0, %v1191
      %v1193 = vrcp.pop %v1105
      %v1194 = vmul.f32 1.0, %v1193
      %v1195 = vrcp.pop %v1108
      %v1196 = vmul.f32 1.0, %v1195
      %v1197 = vrcp.pop %v1111
      %v1198 = vmul.f32 1.0, %v1197
      %v1199 = vrcp.pop %v1114
      %v1200 = vmul.f32 1.0, %v1199
      %v1201 = vrcp.pop %v1117
      %v1202 = vmul.f32 1.0, %v1201
      %v1203 = vrcp.pop %v1120
      %v1204 = vmul.f32 1.0, %v1203
      %v1205 = vrcp.pop %v1123
      %v1206 = vmul.f32 1.0, %v1205
      %v1207 = vrcp.pop %v1126
      %v1208 = vmul.f32 1.0, %v1207
      %v1209 = vrcp.pop %v1129
      %v1210 = vmul.f32 1.0, %v1209
      %v1211 = vrcp.pop %v1132
      %v1212 = vmul.f32 1.0, %v1211
      %v1213 = vrcp.pop %v1135
      %v1214 = vmul.f32 1.0, %v1213
      %v1215 = vrcp.pop %v1138
      %v1216 = vmul.f32 1.0, %v1215
      %v1217 = vrcp.pop %v1141
      %v1218 = vmul.f32 1.0, %v1217
      %v1219 = vrcp.pop %v1144
      %v1220 = vmul.f32 1.0, %v1219
      %v1221 = vrcp.pop %v1147
      %v1222 = vmul.f32 1.0, %v1221
      %v1223 = vrcp.pop %v1150
      %v1224 = vmul.f32 1.0, %v1223
      %v1225 = vrcp.pop %v1153
      %v1226 = vmul.f32 1.0, %v1225
      %v1227 = vrcp.pop %v1156
      %v1228 = vmul.f32 1.0, %v1227
      %v1229 = vrcp.pop %v1159
      %v1230 = vmul.f32 1.0, %v1229
      %v1231 = vrcp.pop %v1162
      %v1232 = vmul.f32 1.0, %v1231
      %v1233 = vrcp.pop %v1165
      %v1234 = vmul.f32 1.0, %v1233
      %v1235 = vrcp.pop %v1168
      %v1236 = vmul.f32 1.0, %v1235
      %v1237 = vrcp.pop %v1171
      %v1238 = vmul.f32 1.0, %v1237
      %v1239 = vrcp.pop %v1174
      %v1240 = vmul.f32 1.0, %v1239
      %v1241 = vrcp.pop %v1177
      %v1242 = vmul.f32 1.0, %v1241
      %v1243 = vrcp.pop %v1180
      %v1244 = vmul.f32 1.0, %v1243
      %v1245 = vmul.f32 %v958, %v1182
      %v1246 = vmul.f32 %v960, %v1182
      %v1247 = vmul.f32 %v962, %v1184
      %v1248 = vmul.f32 %v964, %v1184
      %v1249 = vmul.f32 %v966, %v1186
      %v1250 = vmul.f32 %v968, %v1186
      %v1251 = vmul.f32 %v970, %v1188
      %v1252 = vmul.f32 %v972, %v1188
      %v1253 = vmul.f32 %v974, %v1190
      %v1254 = vmul.f32 %v976, %v1190
      %v1255 = vmul.f32 %v978, %v1192
      %v1256 = vmul.f32 %v980, %v1192
      %v1257 = vmul.f32 %v982, %v1194
      %v1258 = vmul.f32 %v984, %v1194
      %v1259 = vmul.f32 %v986, %v1196
      %v1260 = vmul.f32 %v988, %v1196
      %v1261 = vmul.f32 %v990, %v1198
      %v1262 = vmul.f32 %v992, %v1198
      %v1263 = vmul.f32 %v994, %v1200
      %v1264 = vmul.f32 %v996, %v1200
      %v1265 = vmul.f32 %v998, %v1202
      %v1266 = vmul.f32 %v1000, %v1202
      %v1267 = vmul.f32 %v1002, %v1204
      %v1268 = vmul.f32 %v1004, %v1204
      %v1269 = vmul.f32 %v1006, %v1206
      %v1270 = vmul.f32 %v1008, %v1206
      %v1271 = vmul.f32 %v1010, %v1208
      %v1272 = vmul.f32 %v1012, %v1208
      %v1273 = vmul.f32 %v1014, %v1210
      %v1274 = vmul.f32 %v1016, %v1210
      %v1275 = vmul.f32 %v1018, %v1212
      %v1276 = vmul.f32 %v1020, %v1212
      %v1277 = vmul.f32 %v1022, %v1214
      %v1278 = vmul.f32 %v1024, %v1214
      %v1279 = vmul.f32 %v1026, %v1216
      %v1280 = vmul.f32 %v1028, %v1216
      %v1281 = vmul.f32 %v1030, %v1218
      %v1282 = vmul.f32 %v1032, %v1218
      %v1283 = vmul.f32 %v1034, %v1220
      %v1284 = vmul.f32 %v1036, %v1220
      %v1285 = vmul.f32 %v1038, %v1222
      %v1286 = vmul.f32 %v1040, %v1222
      %v1287 = vmul.f32 %v1042, %v1224
      %v1288 = vmul.f32 %v1044, %v1224
      %v1289 = vmul.f32 %v1046, %v1226
      %v1290 = vmul.f32 %v1048, %v1226
      %v1291 = vmul.f32 %v1050, %v1228
      %v1292 = vmul.f32 %v1052, %v1228
      %v1293 = vmul.f32 %v1054, %v1230
      %v1294 = vmul.f32 %v1056, %v1230
      %v1295 = vmul.f32 %v1058, %v1232
      %v1296 = vmul.f32 %v1060, %v1232
      %v1297 = vmul.f32 %v1062, %v1234
      %v1298 = vmul.f32 %v1064, %v1234
      %v1299 = vmul.f32 %v1066, %v1236
      %v1300 = vmul.f32 %v1068, %v1236
      %v1301 = vmul.f32 %v1070, %v1238
      %v1302 = vmul.f32 %v1072, %v1238
      %v1303 = vmul.f32 %v1074, %v1240
      %v1304 = vmul.f32 %v1076, %v1240
      %v1305 = vmul.f32 %v1078, %v1242
      %v1306 = vmul.f32 %v1080, %v1242
      %v1307 = vmul.f32 %v1082, %v1244
      %v1308 = vmul.f32 %v1084, %v1244
      %v1309 = vmax.f32 %v1245, %v1249
      %v1310 = vmax.f32 %v1247, %v1251
      %v1311 = vmax.f32 %v1309, %v1253
      %v1312 = vmax.f32 %v1310, %v1255
      %v1313 = vmax.f32 %v1311, %v1257
      %v1314 = vmax.f32 %v1312, %v1259
      %v1315 = vmax.f32 %v1313, %v1261
      %v1316 = vmax.f32 %v1314, %v1263
      %v1317 = vmax.f32 %v1315, %v1265
      %v1318 = vmax.f32 %v1316, %v1267
      %v1319 = vmax.f32 %v1317, %v1269
      %v1320 = vmax.f32 %v1318, %v1271
      %v1321 = vmax.f32 %v1319, %v1273
      %v1322 = vmax.f32 %v1320, %v1275
      %v1323 = vmax.f32 %v1321, %v1277
      %v1324 = vmax.f32 %v1322, %v1279
      %v1325 = vmax.f32 %v1323, %v1281
      %v1326 = vmax.f32 %v1324, %v1283
      %v1327 = vmax.f32 %v1325, %v1285
      %v1328 = vmax.f32 %v1326, %v1287
      %v1329 = vmax.f32 %v1327, %v1289
      %v1330 = vmax.f32 %v1328, %v1291
      %v1331 = vmax.f32 %v1329, %v1293
      %v1332 = vmax.f32 %v1330, %v1295
      %v1333 = vmax.f32 %v1331, %v1297
      %v1334 = vmax.f32 %v1332, %v1299
      %v1335 = vmax.f32 %v1333, %v1301
      %v1336 = vmax.f32 %v1334, %v1303
      %v1337 = vmax.f32 %v1335, %v1305
      %v1338 = vmax.f32 %v1336, %v1307
      %v1339 = vmax.f32 %v1337, %v1338
      %v1340 = vmax.f32 %v1246, %v1250
      %v1341 = vmax.f32 %v1248, %v1252
      %v1342 = vmax.f32 %v1340, %v1254
      %v1343 = vmax.f32 %v1341, %v1256
      %v1344 = vmax.f32 %v1342, %v1258
      %v1345 = vmax.f32 %v1343, %v1260
      %v1346 = vmax.f32 %v1344, %v1262
      %v1347 = vmax.f32 %v1345, %v1264
      %v1348 = vmax.f32 %v1346, %v1266
      %v1349 = vmax.f32 %v1347, %v1268
      %v1350 = vmax.f32 %v1348, %v1270
      %v1351 = vmax.f32 %v1349, %v1272
      %v1352 = vmax.f32 %v1350, %v1274
      %v1353 = vmax.f32 %v1351, %v1276
      %v1354 = vmax.f32 %v1352, %v1278
      %v1355 = vmax.f32 %v1353, %v1280
      %v1356 = vmax.f32 %v1354, %v1282
      %v1357 = vmax.f32 %v1355, %v1284
      %v1358 = vmax.f32 %v1356, %v1286
      %v1359 = vmax.f32 %v1357, %v1288
      %v1360 = vmax.f32 %v1358, %v1290
      %v1361 = vmax.f32 %v1359, %v1292
      %v1362 = vmax.f32 %v1360, %v1294
      %v1363 = vmax.f32 %v1361, %v1296
      %v1364 = vmax.f32 %v1362, %v1298
      %v1365 = vmax.f32 %v1363, %v1300
      %v1366 = vmax.f32 %v1364, %v1302
      %v1367 = vmax.f32 %v1365, %v1304
      %v1368 = vmax.f32 %v1366, %v1306
      %v1369 = vmax.f32 %v1367, %v1308
      %v1370 = vmax.f32 %v1368, %v1369
      %v1371 = vld [vmem:[#allocation2] sm:$0xff]
      %v1372 = vld [vmem:[#allocation2 + $0x8] sm:$0xff]
      %v1373 = vmax.f32 %v1371, %v1339
      %v1374 = vmax.f32 %v1372, %v1370
      %1375 = vst [vmem:[#allocation2] sm:$0xff] %v1373
      %1376 = vst [vmem:[#allocation2 + $0x8] sm:$0xff] %v1374
      // Predicated region
      $region33: #{_forward_impl.1} parent=27 // pred_check
        %p1377 = pneg %p189
      $region34: #{_forward_impl.1} parent=27 // pred_check_branch
        %1379 = sbr.rel (%p1377) target = $region36
      $region35: #{_forward_impl.1} parent=27 // pred_region
        %v1380 = vld [vmem:[#allocation2] sm:$0xff]
        %v1381 = vld [vmem:[#allocation2 + $0x8] sm:$0xff]
        %v1382 = vrot.slane %v1380, 4
        %v1383 = vmax.f32 %v1380, %v1382
        %v1384 = vrot.slane %v1383, 2
        %v1385 = vmax.f32 %v1383, %v1384
        %v1386 = vrot.slane %v1385, 1
        %v1387 = vmax.f32 %v1385, %v1386
        %v1388 = vrot.slane %v1381, 4
        %v1389 = vmax.f32 %v1381, %v1388
        %v1390 = vrot.slane %v1389, 2
        %v1391 = vmax.f32 %v1389, %v1390
        %v1392 = vrot.slane %v1391, 1
        %v1393 = vmax.f32 %v1391, %v1392
        %v1394 = vadd.f32 %v1387, %v1393
        %1395 = vadd.xlane.f32.xlu0 %v1394
        %v1396 = vpop.xlane.xlu0 %1395
        %v1397 = vmul.f32 %v1396, 0.00390625
        %v1398 = vadd.f32 %v1397, 1e-05
        %v1399 = vlog2.pop %v1398
        %v1400 = vmul.f32 %v1399, 0.6931472
        %v1401 = vsub.f32 0.0, %v1400
        %vm1402 = vcmask 0
        %1403 = vst.msk [vmem:[%s187] sm:$0x1] %vm1402, %v1401
      $region36: #{_forward_impl.1} parent=27 // pred_fallthru
        _
      %p1404 = scmp.lt.s32.totalorder %s17, 1
      %s1405 = scalar_select %p1404, %s17, 1
      %s1406 = scalar_lea.vmem %s2, %s1405
      // Predicated region
      $region37: #{_forward_impl.1} parent=27 // pred_check
        %p1407 = pneg %p97
      $region38: #{_forward_impl.1} parent=27 // pred_check_branch
        %1409 = sbr.rel (%p1407) target = $region40
      $region39: #{_forward_impl.1} parent=27 // pred_region
        _
      $region40: #{_forward_impl.1} parent=27 // pred_fallthru
        _
    $region28: #{_forward_impl.1} parent=5 // pred_fallthru
      _
    %p1410 = scmp.le.s32.totalorder 2, %s8
    // Predicated region
    $region41: #{_forward_impl.1} parent=5 // pred_check
      %p1411 = pneg %p1410
    $region42: #{_forward_impl.1} parent=5 // pred_check_branch
      %1413 = sbr.rel (%p1411) target = $region44
    $region43: #{_forward_impl.1} parent=5 // pred_region
      %s1414 = ssub.s32 %s8, 2
      // Predicated region
      $region45: #{_forward_impl.1} parent=43 // pred_check
        %p1415 = pneg %p103
      $region46: #{_forward_impl.1} parent=43 // pred_check_branch
        %1417 = sbr.rel (%p1415) target = $region48
      $region47: #{_forward_impl.1} parent=43 // pred_region
        %p1418 = scmp.lt.s32.totalorder %s19, 1
        %s1419 = scalar_select %p1418, %s19, 1
        %s1420 = scalar_lea.vmem %s2, %s1419
      $region48: #{_forward_impl.1} parent=43 // pred_fallthru
        _
    $region44: #{_forward_impl.1} parent=5 // pred_fallthru
      _
  $region6: #{_forward_impl.1} parent=0 // loop_footer
    %s12 = sadd.s32 1, %s8
  $region7: #{_forward_impl.1} parent=0 // loop_footer_branch
    %7 = sbr.rel target = $region3
  $region8: #{_forward_impl.1} parent=0 // loop_exit
    _

</llo_original>
